<compile_context>
chip_gen: v5e
topology: v5e:2x2
jax: 0.10.0
libtpu: 0.0.40
codegen_flags: <defaults>
</compile_context>

<pallas_src>
import functools

import jax
import jax.numpy as jnp
from jax.experimental import pallas as pl
from jax.experimental.pallas import tpu as pltpu


def _round_up(v, m):
    return ((v + m - 1) // m) * m


# ---------------------------------------------------------------------------
# Fused Pallas kernel: grid = (batch_tiles, layers)
# ---------------------------------------------------------------------------
def _fused_forward_kernel(x_ref, w_ref, b_ref, fcw_ref, fcb_ref, o_ref, y_ref):
    """x_ref:   (B_t, I_pad)      f32  input batch tile (resident across l)
       w_ref:   (I_pad, 2*I_pad)  bf16 layer-l [W_yin | W_gy], 128-aligned halves
       b_ref:   (1, 2*I_pad)      f32  layer-l [b_yin | b_gy]
       fcw_ref: (I_pad, O_pad)    bf16 fc weight (transposed, zero-padded)
       fcb_ref: (1, O_pad)        f32
       o_ref:   (B_t, O_pad)      f32  lane-dense output slab
       y_ref:   (B_t, I_pad)      f32  activation carried across the layer axis
    """
    l = pl.program_id(1)

    @pl.when(l == 0)
    def _():
        y_ref[...] = x_ref[...]

    y = y_ref[...]
    feat = y_ref.shape[1]  # I_pad (multiple of 128) -> aligned gate split

    # One fused gate matmul per layer: bf16 on the MXU, f32 accumulation.
    z = jnp.dot(y.astype(jnp.bfloat16), w_ref[...],
                preferred_element_type=jnp.float32) + b_ref[...]
    y_in = jnp.tanh(z[:, :feat])
    g_y = jax.nn.sigmoid(z[:, feat:])
    # y_t = g_y*x + (1-g_y)*y_in  ==  y_in + g_y*(x - y_in)   (f32 elementwise)
    y_new = y_in + g_y * (y - y_in)
    y_ref[...] = y_new

    @pl.when(l == pl.num_programs(1) - 1)
    def _():
        o_ref[...] = (jnp.dot(y_new.astype(jnp.bfloat16), fcw_ref[...],
                              preferred_element_type=jnp.float32)
                      + fcb_ref[...])


@functools.partial(jax.jit, static_argnames=("batch", "output_size"))
def intersection_rnn_forward(x_pad, fused, *, batch, output_size):
    B_pad, I_pad = x_pad.shape
    L = fused["W_cat"].shape[0]
    O_pad = fused["fc_W_pad"].shape[1]
    b_tile = min(B_pad, 128)                       # B_pad is a multiple of b_tile
    grid = (B_pad // b_tile, L)

    out = pl.pallas_call(
        _fused_forward_kernel,
        out_shape=jax.ShapeDtypeStruct((B_pad, O_pad), jnp.float32),
        grid_spec=pltpu.PrefetchScalarGridSpec(
            num_scalar_prefetch=0,
            grid=grid,
            in_specs=[
                pl.BlockSpec((b_tile, I_pad), lambda b, l: (b, 0)),
                pl.BlockSpec((pl.Squeezed(), I_pad, 2 * I_pad),
                             lambda b, l: (l, 0, 0)),
                pl.BlockSpec((pl.Squeezed(), 1, 2 * I_pad),
                             lambda b, l: (l, 0, 0)),
                pl.BlockSpec((I_pad, O_pad), lambda b, l: (0, 0)),
                pl.BlockSpec((1, O_pad), lambda b, l: (0, 0)),
            ],
            out_specs=pl.BlockSpec((b_tile, O_pad), lambda b, l: (b, 0)),
            scratch_shapes=[pltpu.VMEM((b_tile, I_pad), jnp.float32)],
        ),
        compiler_params=pltpu.CompilerParams(
            # batch tiles shard across v7x's 2 TCs; layer axis carries the scratch
            dimension_semantics=("parallel", "arbitrary"),
            # explicit, portable cap (<= scoped/physical on v5e/v6e/v7x);
            # actual usage here is <1 MiB, double-buffered bf16 weight blocks.
            vmem_limit_bytes=32 * 1024 * 1024,
        ),
    )(x_pad, fused["W_cat"], fused["b_cat"],
      fused["fc_W_pad"], fused["fc_b_pad"])
    return out[:batch, :output_size]


# ---------------------------------------------------------------------------
# Parameter initialization (mirrors the PyTorch __init__ shapes)
# ---------------------------------------------------------------------------
def init_cell_params(key, input_size, hidden_size):
    ks = jax.random.split(key, 8)
    glorot = jax.nn.initializers.glorot_normal()
    ortho = jax.nn.initializers.orthogonal()
    return {
        "W_yin": glorot(ks[0], (input_size, input_size), jnp.float32),
        "W_hin": glorot(ks[1], (input_size, hidden_size), jnp.float32),
        "W_gy":  glorot(ks[2], (input_size, input_size), jnp.float32),
        "W_gh":  glorot(ks[3], (input_size, hidden_size), jnp.float32),
        "U_yin": ortho(ks[4], (hidden_size, input_size), jnp.float32),
        "U_hin": ortho(ks[5], (hidden_size, hidden_size), jnp.float32),
        "U_gy":  ortho(ks[6], (hidden_size, input_size), jnp.float32),
        "U_gh":  ortho(ks[7], (hidden_size, hidden_size), jnp.float32),
        "b_yin": jnp.zeros((1, input_size), jnp.float32),
        "b_hin": jnp.zeros((1, hidden_size), jnp.float32),
        "b_gy":  jnp.zeros((1, input_size), jnp.float32),
        "b_gh":  jnp.zeros((1, hidden_size), jnp.float32),
    }


def init_model_params(key, input_size, hidden_size, output_size, layers):
    keys = jax.random.split(key, layers + 1)
    cells = [init_cell_params(keys[i], input_size, hidden_size)
             for i in range(layers)]
    glorot = jax.nn.initializers.glorot_normal()
    fc_w = glorot(keys[-1], (output_size, input_size), jnp.float32)  # (O, I)
    fc = {"W_t": fc_w.T, "b": jnp.zeros((1, output_size), jnp.float32)}
    return {"cells": cells, "fc": fc}


def build_fused_params(params, input_size, output_size):
    """Host-side packing: 128-aligned gate slabs, bf16 weights, padded fc."""
    I_pad = _round_up(max(input_size, 128), 128)
    O_pad = _round_up(max(output_size, 128), 128)

    def pad2(a, rows, cols):
        return jnp.zeros((rows, cols), jnp.float32).at[:a.shape[0], :a.shape[1]].set(a)

    w_list, b_list = [], []
    for p in params["cells"]:
        w_list.append(jnp.concatenate(
            [pad2(p["W_yin"], I_pad, I_pad), pad2(p["W_gy"], I_pad, I_pad)], axis=1))
        b_list.append(jnp.concatenate(
            [pad2(p["b_yin"], 1, I_pad), pad2(p["b_gy"], 1, I_pad)], axis=1))
    W_cat = jnp.stack(w_list, axis=0).astype(jnp.bfloat16)   # (L, I_pad, 2*I_pad)
    b_cat = jnp.stack(b_list, axis=0)                        # (L, 1, 2*I_pad) f32

    fc_w_pad = pad2(params["fc"]["W_t"], I_pad, O_pad).astype(jnp.bfloat16)
    fc_b_pad = pad2(params["fc"]["b"], 1, O_pad)
    return {"W_cat": W_cat, "b_cat": b_cat,
            "fc_W_pad": fc_w_pad, "fc_b_pad": fc_b_pad}


def pad_inputs(x, input_size):
    """Zero-pad x to (B_pad, I_pad); padded rows/lanes stay zero through the
    gate lerp (tanh(0)=0) and contribute nothing to the fc matmul."""
    B = x.shape[0]
    I_pad = _round_up(max(input_size, 128), 128)
    B_pad = _round_up(B, 8)
    if B_pad > 128:
        B_pad = _round_up(B_pad, 128)
    return jnp.zeros((B_pad, I_pad), jnp.float32).at[:B, :x.shape[1]].set(x)


# ---------------------------------------------------------------------------
# References
# ---------------------------------------------------------------------------
def reference_forward_f32(x, params, hidden_size):
    """Full original cell math (incl. the h/U path, which is identically zero
    after reset()), all f32."""
    B = x.shape[0]
    y = x
    for p in params["cells"]:
        h = jnp.zeros((B, hidden_size), jnp.float32)
        y_in = jnp.tanh(y @ p["W_yin"] + h @ p["U_yin"] + p["b_yin"])
        h_in = jnp.tanh(y @ p["W_hin"] + h @ p["U_hin"] + p["b_hin"])
        g_y = jax.nn.sigmoid(y @ p["W_gy"] + h @ p["U_gy"] + p["b_gy"])
        g_h = jax.nn.sigmoid(y @ p["W_gh"] + h @ p["U_gh"] + p["b_gh"])
        y = g_y * y + (g_y - 1.0) * -1.0 * y_in
        h = g_h * h + (g_h - 1.0) * -1.0 * h_in  # internal state, never read
    return y @ params["fc"]["W_t"] + params["fc"]["b"]


def reference_forward_bf16(x, params):
    """Same math with the kernel's bf16-matmul / f32-accumulate casts."""
    y = x
    for p in params["cells"]:
        w = jnp.concatenate([p["W_yin"], p["W_gy"]], axis=1).astype(jnp.bfloat16)
        b = jnp.concatenate([p["b_yin"], p["b_gy"]], axis=1)
        z = jnp.dot(y.astype(jnp.bfloat16), w, preferred_element_type=jnp.float32) + b
        feat = y.shape[1]
        y_in = jnp.tanh(z[:, :feat])
        g_y = jax.nn.sigmoid(z[:, feat:])
        y = y_in + g_y * (y - y_in)
    return (jnp.dot(y.astype(jnp.bfloat16),
                    params["fc"]["W_t"].astype(jnp.bfloat16),
                    preferred_element_type=jnp.float32) + params["fc"]["b"])


if __name__ == "__main__":
    batch = 8
    input_size = 16
    hidden_size = 32
    output_size = 4
    layers = 2

    key = jax.random.PRNGKey(0)
    k_x, k_p = jax.random.split(key)
    x = jax.random.normal(k_x, (batch, input_size), dtype=jnp.float32)
    params = init_model_params(k_p, input_size, hidden_size, output_size, layers)
    fused = build_fused_params(params, input_size, output_size)
    x_pad = pad_inputs(x, input_size)

    out = intersection_rnn_forward(x_pad, fused, batch=batch,
                                   output_size=output_size)
    out = jax.block_until_ready(out)
    assert out.shape == (batch, output_size)

    # Tight check vs a JAX reference using the same bf16-matmul numerics.
    ref_bf16 = reference_forward_bf16(x, params)
    assert jnp.allclose(out, ref_bf16, atol=1e-4, rtol=1e-4), \
        "mismatch vs bf16-matmul reference"

    # Loose check vs the exact f32 module math (tolerance retuned for bf16
    # weights, per review note).
    ref_f32 = reference_forward_f32(x, params, hidden_size)
    assert jnp.allclose(out, ref_f32, atol=1e-1, rtol=1e-1), \
        "mismatch vs f32 reference beyond bf16 tolerance"

    print("KERNEL_OK")
</pallas_src>

<mosaic_0001>
module attributes {stable_mosaic.version = 11 : i64} {
  func.func @_fused_forward_kernel(%arg0: i32, %arg1: i32, %arg2: memref<8x128xf32, #tpu.memory_space<vmem>>, %arg3: memref<1x128x256xbf16, #tpu.memory_space<vmem>>, %arg4: memref<1x1x256xf32, #tpu.memory_space<vmem>>, %arg5: memref<128x128xbf16, #tpu.memory_space<vmem>>, %arg6: memref<1x128xf32, #tpu.memory_space<vmem>>, %arg7: memref<8x128xf32, #tpu.memory_space<vmem>>, %arg8: memref<8x128xf32, #tpu.memory_space<vmem>>) attributes {dimension_semantics = [#tpu.dimension_semantics<parallel>, #tpu.dimension_semantics<arbitrary>], iteration_bounds = array<i64: 1, 2>, scalar_prefetch = 0 : i64, scratch_operands = 1 : i64, tpu.core_type = #tpu.core_type<tc>, window_params = [{transform_indices = @transform_0, window_bounds = array<i64: 8, 128>}, {transform_indices = @transform_1, window_bounds = array<i64: 1, 128, 256>}, {transform_indices = @transform_2, window_bounds = array<i64: 1, 1, 256>}, {pipeline_mode = #tpu.pipeline_mode<synchronous>, transform_indices = @transform_3, window_bounds = array<i64: 128, 128>}, {pipeline_mode = #tpu.pipeline_mode<synchronous>, transform_indices = @transform_4, window_bounds = array<i64: 1, 128>}, {transform_indices = @transform_5, window_bounds = array<i64: 8, 128>}]} {
    %c0_i32 = arith.constant 0 : i32
    %0 = arith.cmpi eq, %arg1, %c0_i32 : i32
    %1 = arith.extui %0 : i1 to i32
    %c0_i32_0 = arith.constant 0 : i32
    %2 = arith.cmpi ne, %1, %c0_i32_0 : i32
    scf.if %2 {
      %c0_12 = arith.constant 0 : index
      %c0_13 = arith.constant 0 : index
      %27 = vector.load %arg2[%c0_12, %c0_13] : memref<8x128xf32, #tpu.memory_space<vmem>>, vector<8x128xf32>
      %c0_14 = arith.constant 0 : index
      %c0_15 = arith.constant 0 : index
      %28 = vector.load %arg8[%c0_14, %c0_15] : memref<8x128xf32, #tpu.memory_space<vmem>>, vector<8x128xf32>
      tpu.vector_store %arg8[%c0_14, %c0_15], %27 {strides = array<i32>} : memref<8x128xf32, #tpu.memory_space<vmem>>, vector<8x128xf32>,
    } else {
    }
    %c0 = arith.constant 0 : index
    %c0_1 = arith.constant 0 : index
    %3 = vector.load %arg8[%c0, %c0_1] : memref<8x128xf32, #tpu.memory_space<vmem>>, vector<8x128xf32>
    %4 = arith.truncf %3 : vector<8x128xf32> to vector<8x128xbf16>
    %c0_2 = arith.constant 0 : index
    %c0_3 = arith.constant 0 : index
    %c0_4 = arith.constant 0 : index
    %5 = vector.load %arg3[%c0_2, %c0_3, %c0_4] : memref<1x128x256xbf16, #tpu.memory_space<vmem>>, vector<1x128x256xbf16>
    %6 = vector.shape_cast %5 : vector<1x128x256xbf16> to vector<128x256xbf16>
    %cst = arith.constant dense<0.000000e+00> : vector<8x256xf32>
    %7 = tpu.matmul %4, %6, %cst {dimension_numbers = #tpu.dot_dimension_numbers<[1], [0], [0], [1], [0, 0, 1, 1], [], []>} : vector<8x128xbf16>, vector<128x256xbf16>, vector<8x256xf32> -> vector<8x256xf32>
    %c0_5 = arith.constant 0 : index
    %c0_6 = arith.constant 0 : index
    %c0_7 = arith.constant 0 : index
    %8 = vector.load %arg4[%c0_5, %c0_6, %c0_7] : memref<1x1x256xf32, #tpu.memory_space<vmem>>, vector<1x1x256xf32>
    %9 = vector.shape_cast %8 : vector<1x1x256xf32> to vector<1x256xf32>
    %10 = vector.broadcast %9 : vector<1x256xf32> to vector<8x256xf32>
    %11 = arith.addf %7, %10 : vector<8x256xf32>
    %12 = vector.extract_strided_slice %11 {offsets = [0, 0], sizes = [8, 128], strides = [1, 1]} : vector<8x256xf32> to vector<8x128xf32>
    %13 = math.tanh %12 : vector<8x128xf32>
    %14 = vector.extract_strided_slice %11 {offsets = [0, 128], sizes = [8, 128], strides = [1, 1]} : vector<8x256xf32> to vector<8x128xf32>
    %15 = arith.negf %14 : vector<8x128xf32>
    %16 = math.exp %15 : vector<8x128xf32>
    %cst_8 = arith.constant 1.000000e+00 : f32
    %17 = vector.broadcast %cst_8 : f32 to vector<8x128xf32>
    %18 = arith.addf %17, %16 : vector<8x128xf32>
    %19 = arith.divf %17, %18 : vector<8x128xf32>
    %20 = arith.subf %3, %13 : vector<8x128xf32>
    %21 = arith.mulf %19, %20 : vector<8x128xf32>
    %22 = arith.addf %13, %21 : vector<8x128xf32>
    %c0_9 = arith.constant 0 : index
    %c0_10 = arith.constant 0 : index
    %23 = vector.load %arg8[%c0_9, %c0_10] : memref<8x128xf32, #tpu.memory_space<vmem>>, vector<8x128xf32>
    tpu.vector_store %arg8[%c0_9, %c0_10], %22 {strides = array<i32>} : memref<8x128xf32, #tpu.memory_space<vmem>>, vector<8x128xf32>,
    %c1_i32 = arith.constant 1 : i32
    %24 = arith.cmpi eq, %arg1, %c1_i32 : i32
    %25 = arith.extui %24 : i1 to i32
    %c0_i32_11 = arith.constant 0 : i32
    %26 = arith.cmpi ne, %25, %c0_i32_11 : i32
    scf.if %26 {
      %27 = arith.truncf %22 : vector<8x128xf32> to vector<8x128xbf16>
      %c0_12 = arith.constant 0 : index
      %c0_13 = arith.constant 0 : index
      %28 = vector.load %arg5[%c0_12, %c0_13] : memref<128x128xbf16, #tpu.memory_space<vmem>>, vector<128x128xbf16>
      %cst_14 = arith.constant dense<0.000000e+00> : vector<8x128xf32>
      %29 = tpu.matmul %27, %28, %cst_14 {dimension_numbers = #tpu.dot_dimension_numbers<[1], [0], [0], [1], [0, 0, 1, 1], [], []>} : vector<8x128xbf16>, vector<128x128xbf16>, vector<8x128xf32> -> vector<8x128xf32>
      %c0_15 = arith.constant 0 : index
      %c0_16 = arith.constant 0 : index
      %30 = vector.load %arg6[%c0_15, %c0_16] : memref<1x128xf32, #tpu.memory_space<vmem>>, vector<1x128xf32>
      %31 = vector.broadcast %30 : vector<1x128xf32> to vector<8x128xf32>
      %32 = arith.addf %29, %31 : vector<8x128xf32>
      %c0_17 = arith.constant 0 : index
      %c0_18 = arith.constant 0 : index
      %33 = vector.load %arg7[%c0_17, %c0_18] : memref<8x128xf32, #tpu.memory_space<vmem>>, vector<8x128xf32>
      tpu.vector_store %arg7[%c0_17, %c0_18], %32 {strides = array<i32>} : memref<8x128xf32, #tpu.memory_space<vmem>>, vector<8x128xf32>,
    } else {
    }
    return
  }
  func.func @transform_0(%arg0: i32, %arg1: i32) -> (i32, i32) {
    %c0_i32 = arith.constant 0 : i32
    %c0_i32_0 = arith.constant 0 : i32
    return %arg0, %c0_i32 : i32, i32
  }
  func.func @transform_1(%arg0: i32, %arg1: i32) -> (i32, i32, i32) {
    %c0_i32 = arith.constant 0 : i32
    %c0_i32_0 = arith.constant 0 : i32
    %c0_i32_1 = arith.constant 0 : i32
    return %arg1, %c0_i32, %c0_i32_0 : i32, i32, i32
  }
  func.func @transform_2(%arg0: i32, %arg1: i32) -> (i32, i32, i32) {
    %c0_i32 = arith.constant 0 : i32
    %c0_i32_0 = arith.constant 0 : i32
    %c0_i32_1 = arith.constant 0 : i32
    return %arg1, %c0_i32, %c0_i32_0 : i32, i32, i32
  }
  func.func @transform_3(%arg0: i32, %arg1: i32) -> (i32, i32) {
    %c0_i32 = arith.constant 0 : i32
    %c0_i32_0 = arith.constant 0 : i32
    %c0_i32_1 = arith.constant 0 : i32
    return %c0_i32, %c0_i32_0 : i32, i32
  }
  func.func @transform_4(%arg0: i32, %arg1: i32) -> (i32, i32) {
    %c0_i32 = arith.constant 0 : i32
    %c0_i32_0 = arith.constant 0 : i32
    %c0_i32_1 = arith.constant 0 : i32
    return %c0_i32, %c0_i32_0 : i32, i32
  }
  func.func @transform_5(%arg0: i32, %arg1: i32) -> (i32, i32) {
    %c0_i32 = arith.constant 0 : i32
    %c0_i32_0 = arith.constant 0 : i32
    return %arg0, %c0_i32 : i32, i32
  }
}

</mosaic_0001>

<llo_original>
// kernel: intersection_rnn_forward.1
$region0: #{intersection_rnn_forward.1}
  #allocation0 [shape = 'u32[]', space=smem, size = 0x4, offset = 0x4, fixed_abs, tag = 'smem constant byte address 0x4 - core index']
  #allocation1 [shape = 'u32[72,128]{1,0:T(1,128)}', space=vmem, size = 0x9000, scoped, tag = 'internal scratch']
  #allocation2 [shape = 'f32[8,128]{1,0:T(8,128)}', space=vmem, size = 0x1000, scoped, tag = 'scratch operand']
  %s0 = inlined_call_operand.hbm [shape: f32[8,128], index: 0, kind: input, shape index: {}]
  %s1 = inlined_call_operand.hbm [shape: bf16[2,128,256], index: 1, kind: input, shape index: {}]
  %s2 = inlined_call_operand.hbm [shape: f32[2,1,256], index: 2, kind: input, shape index: {}]
  %s3 = inlined_call_operand.hbm [shape: bf16[128,128], index: 3, kind: input, shape index: {}]
  %s4 = inlined_call_operand.vmem [shape: f32[1,128], index: 4, kind: input, shape index: {}]
  %s5 = inlined_call_operand.vmem [shape: f32[8,128], index: 5, kind: output, shape index: {}]
  %s6 = sld [smem:[#allocation0]]
  $region77: #{intersection_rnn_forward.1} parent=0
    _
  %s8 = ssub.s32 1, %s6
  %s9 = scalar_select 0, %s8, %s6
  $region1: #{intersection_rnn_forward.1} parent=0
    #allocation3 [shape = 'u8[4096]{0}', space=vmem, size = 0x1000, scoped, tag = 'input window, operand 0, single buffered']
    #allocation4 [shape = 's32[2]{0}', space=sflag, size = 0x8, scoped, tag = 'scoped memory for intersection_rnn_forward.1']
    #allocation5 [shape = 'u8[131072]{0}', space=vmem, size = 0x20000, scoped, tag = 'input window, operand 1']
    #allocation6 [shape = 's32[2]{0}', space=sflag, size = 0x8, scoped, tag = 'scoped memory for intersection_rnn_forward.1']
    #allocation7 [shape = 'u8[2048]{0}', space=vmem, size = 0x800, scoped, tag = 'input window, operand 2']
    #allocation8 [shape = 'u8[32768]{0}', space=vmem, size = 0x8000, scoped, tag = 'input window, operand 3, single buffered']
    #allocation9 [shape = 's32[1]{0}', space=sflag, size = 0x4, scoped, tag = 'scoped memory for intersection_rnn_forward.1']
    %10 = vsyncpa [#allocation4], 0
    %11 = vsyncpa [#allocation6], 0
    %s12 = scalar_lea.sflag [#allocation6], 1
    %13 = vsyncpa %s12, 0
    %14 = vsyncpa [#allocation9], 0
    loop: start=0, step=1, limit=4
    $region2: #{intersection_rnn_forward.1} parent=1 // loop_pre_header
      _
    $region3: #{intersection_rnn_forward.1} parent=1 // loop_header
      %s16 = sphi 0, %s20
      %p17 = scmp.ge.s32.totalorder %s16, 4
      %s23 = sphi 0, %s35
      %s24 = sphi 0, %s31
      %s25 = sphi 0, %s23
      %s26 = sphi 0, %s24
      %s27 = sphi 0, %s25
      %s28 = sphi 0, %s26
      %s38 = sphi 0, %s40
      %s41 = sphi 0, %s38
      %s42 = sphi 0, %s41
      %s58 = sphi 0, %s42
      %s64 = sphi 0, %s66
      %s67 = sphi 0, %s64
      %s68 = sphi 0, %s67
      %s84 = sphi 0, %s68
      %s90 = sphi 0, %s92
      %s93 = sphi 0, %s90
      %s94 = sphi 0, %s93
      %s110 = sphi 0, %s94
      %s114 = sphi 0, %s114
      %s116 = sphi 0, %s114
      %s117 = sphi 0, %s116
      %s131 = sphi 0, %s117
      %s135 = sphi 0, %s135
      %s137 = sphi 0, %s135
      %s138 = sphi 0, %s137
      %s152 = sphi 0, %s138
      %s158 = sphi 0, %s160
      %s161 = sphi 0, %s158
      %s162 = sphi 0, %s161
      %s178 = sphi 0, %s162
    $region4: #{intersection_rnn_forward.1} parent=1 // loop_header_branch
      %19 = sbr.rel (%p17) target = $region8
    $region5: #{intersection_rnn_forward.1} parent=1 // loop_body
      %s21 = ssub.s32 %s16, 1
      %s22 = ssub.s32 %s16, 2
      %s29 = sadd.s32 1, %s24
      %p30 = scmp.ge.s32.totalorder %s29, 2
      %s31 = scalar_select %p30, 0, %s29
      %s32 = sadd.s32 1, %s23
      %s33 = scalar_select %p30, %s32, %s23
      %p34 = scmp.ge.s32.totalorder %s33, 1
      %s35 = scalar_select %p34, 0, %s33
      %s36 = ssub.s32 %s23, %s35
      %p37 = scmp.eq.s32.totalorder %s36, 0
      %s39 = sadd.s32 %s38, 1
      %s40 = scalar_select %p37, %s38, %s39
      %p43 = pneg %p37
      %p44 = scmp.eq.s32.totalorder %s16, 1
      %p45 = por %p43, %p44
      %p46 = scmp.ne.s32.totalorder %s38, %s41
      %p47 = scmp.eq.s32.totalorder %s16, 0
      %p48 = por %p46, %p47
      %p49 = scmp.ne.s32.totalorder %s38, %s41
      %p50 = scmp.eq.s32.totalorder %s21, 1
      %p51 = por %p49, %p50
      %p52 = scmp.ne.s32.totalorder %s41, %s42
      %p53 = scmp.eq.s32.totalorder %s21, 0
      %p54 = por %p52, %p53
      %p55 = scmp.ne.s32.totalorder %s41, %s42
      %p56 = scmp.eq.s32.totalorder %s22, 1
      %p57 = por %p55, %p56
      %p59 = scmp.ne.s32.totalorder %s42, %s58
      %p60 = scmp.eq.s32.totalorder %s22, 0
      %p61 = por %p59, %p60
      %s62 = ssub.s32 %s24, %s31
      %p63 = scmp.eq.s32.totalorder %s62, 0
      %s65 = sadd.s32 %s64, 1
      %s66 = scalar_select %p63, %s64, %s65
      %p69 = pneg %p63
      %p70 = scmp.eq.s32.totalorder %s16, 1
      %p71 = por %p69, %p70
      %p72 = scmp.ne.s32.totalorder %s64, %s67
      %p73 = scmp.eq.s32.totalorder %s16, 0
      %p74 = por %p72, %p73
      %p75 = scmp.ne.s32.totalorder %s64, %s67
      %p76 = scmp.eq.s32.totalorder %s21, 1
      %p77 = por %p75, %p76
      %p78 = scmp.ne.s32.totalorder %s67, %s68
      %p79 = scmp.eq.s32.totalorder %s21, 0
      %p80 = por %p78, %p79
      %p81 = scmp.ne.s32.totalorder %s67, %s68
      %p82 = scmp.eq.s32.totalorder %s22, 1
      %p83 = por %p81, %p82
      %p85 = scmp.ne.s32.totalorder %s68, %s84
      %p86 = scmp.eq.s32.totalorder %s22, 0
      %p87 = por %p85, %p86
      %s88 = ssub.s32 %s24, %s31
      %p89 = scmp.eq.s32.totalorder %s88, 0
      %s91 = sadd.s32 %s90, 1
      %s92 = scalar_select %p89, %s90, %s91
      %p95 = pneg %p89
      %p96 = scmp.eq.s32.totalorder %s16, 1
      %p97 = por %p95, %p96
      %p98 = scmp.ne.s32.totalorder %s90, %s93
      %p99 = scmp.eq.s32.totalorder %s16, 0
      %p100 = por %p98, %p99
      %p101 = scmp.ne.s32.totalorder %s90, %s93
      %p102 = scmp.eq.s32.totalorder %s21, 1
      %p103 = por %p101, %p102
      %p104 = scmp.ne.s32.totalorder %s93, %s94
      %p105 = scmp.eq.s32.totalorder %s21, 0
      %p106 = por %p104, %p105
      %p107 = scmp.ne.s32.totalorder %s93, %s94
      %p108 = scmp.eq.s32.totalorder %s22, 1
      %p109 = por %p107, %p108
      %p111 = scmp.ne.s32.totalorder %s94, %s110
      %p112 = scmp.eq.s32.totalorder %s22, 0
      %p113 = por %p111, %p112
      %s115 = sadd.s32 %s114, 1
      %p118 = scmp.eq.s32.totalorder %s16, 1
      %p119 = scmp.ne.s32.totalorder %s114, %s116
      %p120 = scmp.eq.s32.totalorder %s16, 0
      %p121 = por %p119, %p120
      %p122 = scmp.ne.s32.totalorder %s114, %s116
      %p123 = scmp.eq.s32.totalorder %s21, 1
      %p124 = por %p122, %p123
      %p125 = scmp.ne.s32.totalorder %s116, %s117
      %p126 = scmp.eq.s32.totalorder %s21, 0
      %p127 = por %p125, %p126
      %p128 = scmp.ne.s32.totalorder %s116, %s117
      %p129 = scmp.eq.s32.totalorder %s22, 1
      %p130 = por %p128, %p129
      %p132 = scmp.ne.s32.totalorder %s117, %s131
      %p133 = scmp.eq.s32.totalorder %s22, 0
      %p134 = por %p132, %p133
      %s136 = sadd.s32 %s135, 1
      %p139 = scmp.eq.s32.totalorder %s16, 1
      %p140 = scmp.ne.s32.totalorder %s135, %s137
      %p141 = scmp.eq.s32.totalorder %s16, 0
      %p142 = por %p140, %p141
      %p143 = scmp.ne.s32.totalorder %s135, %s137
      %p144 = scmp.eq.s32.totalorder %s21, 1
      %p145 = por %p143, %p144
      %p146 = scmp.ne.s32.totalorder %s137, %s138
      %p147 = scmp.eq.s32.totalorder %s21, 0
      %p148 = por %p146, %p147
      %p149 = scmp.ne.s32.totalorder %s137, %s138
      %p150 = scmp.eq.s32.totalorder %s22, 1
      %p151 = por %p149, %p150
      %p153 = scmp.ne.s32.totalorder %s138, %s152
      %p154 = scmp.eq.s32.totalorder %s22, 0
      %p155 = por %p153, %p154
      %s156 = ssub.s32 %s23, %s35
      %p157 = scmp.eq.s32.totalorder %s156, 0
      %s159 = sadd.s32 %s158, 1
      %s160 = scalar_select %p157, %s158, %s159
      %p163 = pneg %p157
      %p164 = scmp.eq.s32.totalorder %s16, 1
      %p165 = por %p163, %p164
      %p166 = scmp.ne.s32.totalorder %s158, %s161
      %p167 = scmp.eq.s32.totalorder %s16, 0
      %p168 = por %p166, %p167
      %p169 = scmp.ne.s32.totalorder %s158, %s161
      %p170 = scmp.eq.s32.totalorder %s21, 1
      %p171 = por %p169, %p170
      %p172 = scmp.ne.s32.totalorder %s161, %s162
      %p173 = scmp.eq.s32.totalorder %s21, 0
      %p174 = por %p172, %p173
      %p175 = scmp.ne.s32.totalorder %s161, %s162
      %p176 = scmp.eq.s32.totalorder %s22, 1
      %p177 = por %p175, %p176
      %p179 = scmp.ne.s32.totalorder %s162, %s178
      %p180 = scmp.eq.s32.totalorder %s22, 0
      %p181 = por %p179, %p180
      %p182 = scmp.le.s32.totalorder 1, %s16
      %p183 = scmp.lt.s32.totalorder %s16, 3
      %p184 = pnand %p182, %p183
      %p185 = pneg %p184
      // Predicated region
      $region9: #{intersection_rnn_forward.1} parent=5 // pred_check
        _
      $region10: #{intersection_rnn_forward.1} parent=5 // pred_check_branch
        %187 = sbr.rel (%p184) target = $region12
      $region11: #{intersection_rnn_forward.1} parent=5 // pred_region
        %s188 = ssub.s32 %s16, 1
        // Predicated region
        $region13: #{intersection_rnn_forward.1} parent=11 // pred_check
          %p189 = pneg %p54
        $region14: #{intersection_rnn_forward.1} parent=11 // pred_check_branch
          %191 = sbr.rel (%p189) target = $region16
        $region15: #{intersection_rnn_forward.1} parent=11 // pred_region
          %193 = vsyncadd [#allocation4], 0
          %s194 = smul.addr %s25, 8
          %s195 = scalar_lea.hbm %s0, %s194
          %s197 = sshll.u32 %s195, 4
          %s198 = int_to_ptr.hbm [resolvable:$true] %s197
          %s199 = sshll.u32 [#allocation3], 4
          %s200 = int_to_ptr.vmem [resolvable:$true] %s199
          %202 = dma.hbm_to_vmem [thread:$0]  %s198, 128, %s200, [#allocation4]
        $region16: #{intersection_rnn_forward.1} parent=11 // pred_fallthru
          _
        // Predicated region
        $region17: #{intersection_rnn_forward.1} parent=11 // pred_check
          %p203 = pneg %p127
        $region18: #{intersection_rnn_forward.1} parent=11 // pred_check_branch
          %205 = sbr.rel (%p203) target = $region20
        $region19: #{intersection_rnn_forward.1} parent=11 // pred_region
          %207 = vsyncadd [#allocation9], 0
          %s208 = sshll.u32 %s3, 4
          %s209 = int_to_ptr.hbm [resolvable:$true] %s208
          %s210 = sshll.u32 [#allocation8], 4
          %s211 = int_to_ptr.vmem [resolvable:$true] %s210
          %216 = dma.hbm_to_vmem [thread:$0]  %s209, 1024, %s211, [#allocation9], 64, 64, 4
        $region20: #{intersection_rnn_forward.1} parent=11 // pred_fallthru
          _
        // Predicated region
        $region21: #{intersection_rnn_forward.1} parent=11 // pred_check
          %p217 = pneg %p148
        $region22: #{intersection_rnn_forward.1} parent=11 // pred_check_branch
          %219 = sbr.rel (%p217) target = $region24
        $region23: #{intersection_rnn_forward.1} parent=11 // pred_region
          _
        $region24: #{intersection_rnn_forward.1} parent=11 // pred_fallthru
          _
      $region12: #{intersection_rnn_forward.1} parent=5 // pred_fallthru
        _
      %p220 = scmp.lt.s32.totalorder %s16, 2
      // Predicated region
      $region25: #{intersection_rnn_forward.1} parent=5 // pred_check
        %p221 = pneg %p220
      $region26: #{intersection_rnn_forward.1} parent=5 // pred_check_branch
        %223 = sbr.rel (%p221) target = $region28
      $region27: #{intersection_rnn_forward.1} parent=5 // pred_region
        // Predicated region
        $region29: #{intersection_rnn_forward.1} parent=27 // pred_check
          %p224 = pneg %p74
        $region30: #{intersection_rnn_forward.1} parent=27 // pred_check_branch
          %226 = sbr.rel (%p224) target = $region32
        $region31: #{intersection_rnn_forward.1} parent=27 // pred_region
          %s227 = sand.u32 %s16, 1
          %s228 = scalar_lea.sflag [#allocation6], %s227
          %s229 = sand.u32 %s64, 1
          %s230 = smul.addr %s229, 128
          %s231 = scalar_lea.vmem [#allocation5], %s230
          %233 = vsyncadd %s228, 0
          %s234 = smul.addr %s24, 32
          %s235 = smul.addr %s234, 4
          %s236 = scalar_lea.hbm %s1, %s235
          %s237 = sshll.u32 %s236, 4
          %s238 = int_to_ptr.hbm [resolvable:$true] %s237
          %s239 = sshll.u32 %s231, 4
          %s240 = int_to_ptr.vmem [resolvable:$true] %s239
          %245 = dma.hbm_to_vmem [thread:$0]  %s238, 2048, %s240, %s228, 128, 128, 8
        $region32: #{intersection_rnn_forward.1} parent=27 // pred_fallthru
          _
        // Predicated region
        $region33: #{intersection_rnn_forward.1} parent=27 // pred_check
          %p246 = pneg %p100
        $region34: #{intersection_rnn_forward.1} parent=27 // pred_check_branch
          %248 = sbr.rel (%p246) target = $region36
        $region35: #{intersection_rnn_forward.1} parent=27 // pred_region
          %s249 = sand.u32 %s16, 1
          %s250 = scalar_lea.sflag [#allocation6], %s249
          %s251 = sand.u32 %s90, 1
          %s252 = smul.addr %s251, 2
          %s253 = scalar_lea.vmem [#allocation7], %s252
          %255 = vsyncadd %s250, 0
          %s256 = smul.addr %s24, 2
          %s257 = scalar_lea.hbm %s2, %s256
          %s259 = sshll.u32 %s257, 4
          %s260 = int_to_ptr.hbm [resolvable:$true] %s259
          %s261 = sshll.u32 %s253, 4
          %s262 = int_to_ptr.vmem [resolvable:$true] %s261
          %264 = dma.hbm_to_vmem [thread:$0]  %s260, 32, %s262, %s250
        $region36: #{intersection_rnn_forward.1} parent=27 // pred_fallthru
          _
      $region28: #{intersection_rnn_forward.1} parent=5 // pred_fallthru
        _
      %p265 = scmp.le.s32.totalorder 1, %s16
      %p266 = scmp.lt.s32.totalorder %s16, 3
      %p267 = pnand %p265, %p266
      %p268 = pneg %p267
      // Predicated region
      $region37: #{intersection_rnn_forward.1} parent=5 // pred_check
        _
      $region38: #{intersection_rnn_forward.1} parent=5 // pred_check_branch
        %270 = sbr.rel (%p267) target = $region40
      $region39: #{intersection_rnn_forward.1} parent=5 // pred_region
        %s271 = ssub.s32 %s16, 1
        // Predicated region
        $region41: #{intersection_rnn_forward.1} parent=39 // pred_check
          %p272 = pneg %p54
        $region42: #{intersection_rnn_forward.1} parent=39 // pred_check_branch
          %274 = sbr.rel (%p272) target = $region44
        $region43: #{intersection_rnn_forward.1} parent=39 // pred_region
          %276 = dma.done [#allocation4], 128
        $region44: #{intersection_rnn_forward.1} parent=39 // pred_fallthru
          _
        %s277 = sand.u32 %s21, 1
        %s278 = scalar_lea.sflag [#allocation6], %s277
        %s279 = sand.u32 %s67, 1
        %s280 = smul.addr %s279, 128
        %s281 = scalar_lea.vmem [#allocation5], %s280
        // Predicated region
        $region45: #{intersection_rnn_forward.1} parent=39 // pred_check
          %p282 = pneg %p80
        $region46: #{intersection_rnn_forward.1} parent=39 // pred_check_branch
          %284 = sbr.rel (%p282) target = $region48
        $region47: #{intersection_rnn_forward.1} parent=39 // pred_region
          %286 = dma.done %s278, 2048
        $region48: #{intersection_rnn_forward.1} parent=39 // pred_fallthru
          _
        %s287 = sand.u32 %s21, 1
        %s288 = scalar_lea.sflag [#allocation6], %s287
        %s289 = sand.u32 %s93, 1
        %s290 = smul.addr %s289, 2
        %s291 = scalar_lea.vmem [#allocation7], %s290
        // Predicated region
        $region49: #{intersection_rnn_forward.1} parent=39 // pred_check
          %p292 = pneg %p106
        $region50: #{intersection_rnn_forward.1} parent=39 // pred_check_branch
          %294 = sbr.rel (%p292) target = $region52
        $region51: #{intersection_rnn_forward.1} parent=39 // pred_region
          %296 = dma.done %s288, 32
        $region52: #{intersection_rnn_forward.1} parent=39 // pred_fallthru
          _
        // Predicated region
        $region53: #{intersection_rnn_forward.1} parent=39 // pred_check
          %p297 = pneg %p127
        $region54: #{intersection_rnn_forward.1} parent=39 // pred_check_branch
          %299 = sbr.rel (%p297) target = $region56
        $region55: #{intersection_rnn_forward.1} parent=39 // pred_region
          %301 = dma.done [#allocation9], 1024
        $region56: #{intersection_rnn_forward.1} parent=39 // pred_fallthru
          _
        %p302 = pneg %p54
        %p303 = pneg %p51
        %s304 = sand.u32 %s21, 1
        %s305 = scalar_lea.sflag [#allocation6], %s304
        %s306 = sand.u32 %s67, 1
        %s307 = smul.addr %s306, 128
        %s308 = scalar_lea.vmem [#allocation5], %s307
        %p309 = pneg %p80
        %p310 = pneg %p77
        %s311 = sand.u32 %s21, 1
        %s312 = scalar_lea.sflag [#allocation6], %s311
        %s313 = sand.u32 %s93, 1
        %s314 = smul.addr %s313, 2
        %s315 = scalar_lea.vmem [#allocation7], %s314
        %p316 = pneg %p106
        %p317 = pneg %p103
        %p318 = pneg %p127
        %p319 = pneg %p124
        %p320 = pneg %p148
        %p321 = pneg %p145
        %p322 = pneg %p174
        %p323 = pneg %p171
        %p324 = scmp.lt.s32.totalorder %s25, 0
        %s325 = scalar_select %p324, %s25, 0
        %s326 = smul.addr %s325, 8
        %s327 = scalar_lea.vmem %s5, %s326
        %p328 = scmp.lt.s32.totalorder %s25, 0
        %s329 = scalar_select %p328, %s25, 0
        %s330 = smul.addr %s329, 8
        %s331 = scalar_lea.vmem %s5, %s330
        %p332 = scmp.eq.s32.totalorder %s26, 0
        // Predicated region
        $region57: #{intersection_rnn_forward.1} parent=39 // pred_check
          %p333 = pneg %p332
        $region58: #{intersection_rnn_forward.1} parent=39 // pred_check_branch
          %335 = sbr.rel (%p333) target = $region60
        $region59: #{intersection_rnn_forward.1} parent=39 // pred_region
          %v336 = vld [vmem:[#allocation3] sm:$0xff]
          %337 = vst [vmem:[#allocation2] sm:$0xff] %v336
        $region60: #{intersection_rnn_forward.1} parent=39 // pred_fallthru
          _
        %v338 = vld [vmem:[#allocation2] sm:$0xff]
        %v339 = vpack.c.bf16 %v338, %v338
        %v340 = vld [vmem:[%s281] sm:$0xff]
        %v341 = vld [vmem:[%s281 + $0x8] sm:$0xff]
        %v342 = vld [vmem:[%s281 + $0x10] sm:$0xff]
        %v343 = vld [vmem:[%s281 + $0x18] sm:$0xff]
        %v344 = vld [vmem:[%s281 + $0x20] sm:$0xff]
        %v345 = vld [vmem:[%s281 + $0x28] sm:$0xff]
        %v346 = vld [vmem:[%s281 + $0x30] sm:$0xff]
        %v347 = vld [vmem:[%s281 + $0x38] sm:$0xff]
        %v348 = vld [vmem:[%s281 + $0x40] sm:$0xff]
        %v349 = vld [vmem:[%s281 + $0x48] sm:$0xff]
        %v350 = vld [vmem:[%s281 + $0x50] sm:$0xff]
        %v351 = vld [vmem:[%s281 + $0x58] sm:$0xff]
        %v352 = vld [vmem:[%s281 + $0x60] sm:$0xff]
        %v353 = vld [vmem:[%s281 + $0x68] sm:$0xff]
        %v354 = vld [vmem:[%s281 + $0x70] sm:$0xff]
        %v355 = vld [vmem:[%s281 + $0x78] sm:$0xff]
        %v356 = vld [vmem:[%s291] sm:$0x3]
        %v358 = vperm.slane %v356, 0
        %v359 = vperm.slane %v356, 1
        %v378 = vunpack.c.l.b16 %v340
        %v379 = vunpack.c.h.b16 %v340
        %v380 = vunpack.c.l.b16 %v341
        %v381 = vunpack.c.h.b16 %v341
        %v382 = vunpack.c.l.b16 %v342
        %v383 = vunpack.c.h.b16 %v342
        %v384 = vunpack.c.l.b16 %v343
        %v385 = vunpack.c.h.b16 %v343
        %v386 = vunpack.c.l.b16 %v344
        %v387 = vunpack.c.h.b16 %v344
        %v388 = vunpack.c.l.b16 %v345
        %v389 = vunpack.c.h.b16 %v345
        %v390 = vunpack.c.l.b16 %v346
        %v391 = vunpack.c.h.b16 %v346
        %v392 = vunpack.c.l.b16 %v347
        %v393 = vunpack.c.h.b16 %v347
        %v394 = vunpack.c.l.b16 %v348
        %v395 = vunpack.c.h.b16 %v348
        %v396 = vunpack.c.l.b16 %v349
        %v397 = vunpack.c.h.b16 %v349
        %v398 = vunpack.c.l.b16 %v350
        %v399 = vunpack.c.h.b16 %v350
        %v400 = vunpack.c.l.b16 %v351
        %v401 = vunpack.c.h.b16 %v351
        %v402 = vunpack.c.l.b16 %v352
        %v403 = vunpack.c.h.b16 %v352
        %v404 = vunpack.c.l.b16 %v353
        %v405 = vunpack.c.h.b16 %v353
        %v406 = vunpack.c.l.b16 %v354
        %v407 = vunpack.c.h.b16 %v354
        %v408 = vunpack.c.l.b16 %v355
        %v409 = vunpack.c.h.b16 %v355
        %v410 = vpack.c.b16 %v380, %v378
        %v411 = vpack.c.b16 %v381, %v379
        %v412 = vpack.c.b16 %v384, %v382
        %v413 = vpack.c.b16 %v385, %v383
        %v414 = vpack.c.b16 %v388, %v386
        %v415 = vpack.c.b16 %v389, %v387
        %v416 = vpack.c.b16 %v392, %v390
        %v417 = vpack.c.b16 %v393, %v391
        %v418 = vpack.c.b16 %v396, %v394
        %v419 = vpack.c.b16 %v397, %v395
        %v420 = vpack.c.b16 %v400, %v398
        %v421 = vpack.c.b16 %v401, %v399
        %v422 = vpack.c.b16 %v404, %v402
        %v423 = vpack.c.b16 %v405, %v403
        %v424 = vpack.c.b16 %v408, %v406
        %v425 = vpack.c.b16 %v409, %v407
        %442 = vmatpush.bf16.msra.mxu0 %v424
        %443 = vmatpush.bf16.msra.mxu0 %v422
        %444 = vmatpush.bf16.msra.mxu0 %v420
        %445 = vmatpush.bf16.msra.mxu0 %v418
        %446 = vmatpush.bf16.msra.mxu0 %v416
        %447 = vmatpush.bf16.msra.mxu0 %v414
        %448 = vmatpush.bf16.msra.mxu0 %v412
        %449 = vmatpush.bf16.msra.mxu0 %v410
        %450 = vmatmul.bf16.gmra.mxu0 %v339
        %v451 = vpop.f32.mrf.mxu0
        %v452 = vadd.f32 %v358, %v451
        %v453 = vpop.f32.mrf.mxu0
        %454 = vdwg.mxu0
        %455 = vmatpush.bf16.msra.mxu0 %v425
        %456 = vmatpush.bf16.msra.mxu0 %v423
        %457 = vmatpush.bf16.msra.mxu0 %v421
        %458 = vmatpush.bf16.msra.mxu0 %v419
        %459 = vmatpush.bf16.msra.mxu0 %v417
        %460 = vmatpush.bf16.msra.mxu0 %v415
        %461 = vmatpush.bf16.msra.mxu0 %v413
        %462 = vmatpush.bf16.msra.mxu0 %v411
        %463 = vmatmul.bf16.gmra.mxu0 %v339
        %v464 = vpop.f32.mrf.mxu0
        %v465 = vadd.f32 %v359, %v464
        %v466 = vpop.f32.mrf.mxu0
        %467 = vdwg.mxu0
        %v468 = vtanh.pop %v452
        %v469 = vxor.u32 %v465, 2147483648
        %v470 = vmul.f32 %v469, 1.442695
        %v471 = vpow.pop %v470
        %v472 = vadd.f32 %v471, 1.0
        %v473 = vrcp.pop %v472
        %v474 = vmul.f32 %v472, %v473
        %v475 = vsub.f32 1.0, %v474
        %v476 = vmul.f32 %v473, %v475
        %v477 = vadd.f32 %v473, %v476
        %vm478 = vweird.f32 %v472
        %vm479 = vweird.f32 %v473
        %vm480 = vmor %vm478, %vm479
        %v481 = vsel %vm480, %v473, %v477
        %v482 = vand.u32 2147483647, %v472
        %vm483 = vcmp.eq.f32.partialorder %v482, 8.507059e+37
        %v484 = vand.u32 %v472, 2147483648
        %v485 = vor.u32 1.1754944e-38, %v484
        %v486 = vsel %vm483, %v485, %v481
        %v487 = vmul.f32 1.0, %v486
        %v488 = vsub.f32 %v338, %v468
        %v489 = vmul.f32 %v487, %v488
        %v490 = vadd.f32 %v468, %v489
        %491 = vst [vmem:[#allocation2] sm:$0xff] %v490
        %p492 = scmp.eq.s32.totalorder %s26, 1
        // Predicated region
        $region61: #{intersection_rnn_forward.1} parent=39 // pred_check
          %p493 = pneg %p492
        $region62: #{intersection_rnn_forward.1} parent=39 // pred_check_branch
          %495 = sbr.rel (%p493) target = $region64
        $region63: #{intersection_rnn_forward.1} parent=39 // pred_region
          %v496 = vpack.c.bf16 %v490, %v490
          %v497 = vld [vmem:[#allocation8] sm:$0xf]
          %v498 = vld [vmem:[#allocation8 + $0x4] sm:$0xf]
          %v499 = vld [vmem:[#allocation8 + $0x8] sm:$0xf]
          %v500 = vld [vmem:[#allocation8 + $0xc] sm:$0xf]
          %v501 = vld [vmem:[#allocation8 + $0x10] sm:$0xf]
          %v502 = vld [vmem:[#allocation8 + $0x14] sm:$0xf]
          %v503 = vld [vmem:[#allocation8 + $0x18] sm:$0xf]
          %v504 = vld [vmem:[#allocation8 + $0x1c] sm:$0xf]
          %v505 = vld [vmem:[#allocation8 + $0x20] sm:$0xf]
          %v506 = vld [vmem:[#allocation8 + $0x24] sm:$0xf]
          %v507 = vld [vmem:[#allocation8 + $0x28] sm:$0xf]
          %v508 = vld [vmem:[#allocation8 + $0x2c] sm:$0xf]
          %v509 = vld [vmem:[#allocation8 + $0x30] sm:$0xf]
          %v510 = vld [vmem:[#allocation8 + $0x34] sm:$0xf]
          %v511 = vld [vmem:[#allocation8 + $0x38] sm:$0xf]
          %v512 = vld [vmem:[#allocation8 + $0x3c] sm:$0xf]
          %v513 = vld [vmem:[%s4] sm:$0x1]
          %v515 = vperm.slane %v513, 0
          %v533 = vunpack.c.l.b16 %v497
          %v534 = vunpack.c.l.b16 %v498
          %v535 = vunpack.c.l.b16 %v499
          %v536 = vunpack.c.l.b16 %v500
          %v537 = vunpack.c.l.b16 %v501
          %v538 = vunpack.c.l.b16 %v502
          %v539 = vunpack.c.l.b16 %v503
          %v540 = vunpack.c.l.b16 %v504
          %v541 = vunpack.c.l.b16 %v505
          %v542 = vunpack.c.l.b16 %v506
          %v543 = vunpack.c.l.b16 %v507
          %v544 = vunpack.c.l.b16 %v508
          %v545 = vunpack.c.l.b16 %v509
          %v546 = vunpack.c.l.b16 %v510
          %v547 = vunpack.c.l.b16 %v511
          %v548 = vunpack.c.l.b16 %v512
          %v549 = vpack.c.b16 %v534, %v533
          %v550 = vpack.c.b16 %v536, %v535
          %v551 = vpack.c.b16 %v538, %v537
          %v552 = vpack.c.b16 %v540, %v539
          %v553 = vpack.c.b16 %v542, %v541
          %v554 = vpack.c.b16 %v544, %v543
          %v555 = vpack.c.b16 %v546, %v545
          %v556 = vpack.c.b16 %v548, %v547
          %565 = vmatpush.bf16.msra.mxu0 %v556
          %566 = vmatpush.bf16.msra.mxu0 %v555
          %567 = vmatpush.bf16.msra.mxu0 %v554
          %568 = vmatpush.bf16.msra.mxu0 %v553
          %569 = vmatpush.bf16.msra.mxu0 %v552
          %570 = vmatpush.bf16.msra.mxu0 %v551
          %571 = vmatpush.bf16.msra.mxu0 %v550
          %572 = vmatpush.bf16.msra.mxu0 %v549
          %573 = vmatmul.bf16.gmra.mxu0 %v496
          %v574 = vpop.f32.mrf.mxu0
          %v575 = vadd.f32 %v515, %v574
          %v576 = vpop.f32.mrf.mxu0
          %577 = vdwg.mxu0
          %578 = vst [vmem:[%s331] sm:$0xff] %v575
        $region64: #{intersection_rnn_forward.1} parent=39 // pred_fallthru
          _
        %p579 = scmp.lt.s32.totalorder %s25, 0
        %s580 = scalar_select %p579, %s25, 0
        %s581 = smul.addr %s580, 8
        %s582 = scalar_lea.vmem %s5, %s581
        // Predicated region
        $region65: #{intersection_rnn_forward.1} parent=39 // pred_check
          %p583 = pneg %p171
        $region66: #{intersection_rnn_forward.1} parent=39 // pred_check_branch
          %585 = sbr.rel (%p583) target = $region68
        $region67: #{intersection_rnn_forward.1} parent=39 // pred_region
          _
        $region68: #{intersection_rnn_forward.1} parent=39 // pred_fallthru
          _
        // Predicated region
        $region69: #{intersection_rnn_forward.1} parent=39 // pred_check
          %p586 = pneg %p171
        $region70: #{intersection_rnn_forward.1} parent=39 // pred_check_branch
          %588 = sbr.rel (%p586) target = $region72
        $region71: #{intersection_rnn_forward.1} parent=39 // pred_region
          %p589 = scmp.lt.s32.totalorder %s25, 0
          %s590 = scalar_select %p589, %s25, 0
          %s591 = smul.addr %s590, 8
          %s592 = scalar_lea.vmem %s5, %s591
        $region72: #{intersection_rnn_forward.1} parent=39 // pred_fallthru
          _
      $region40: #{intersection_rnn_forward.1} parent=5 // pred_fallthru
        _
      %p593 = scmp.le.s32.totalorder 2, %s16
      // Predicated region
      $region73: #{intersection_rnn_forward.1} parent=5 // pred_check
        %p594 = pneg %p593
      $region74: #{intersection_rnn_forward.1} parent=5 // pred_check_branch
        %596 = sbr.rel (%p594) target = $region76
      $region75: #{intersection_rnn_forward.1} parent=5 // pred_region
        %s597 = ssub.s32 %s16, 2
      $region76: #{intersection_rnn_forward.1} parent=5 // pred_fallthru
        _
    $region6: #{intersection_rnn_forward.1} parent=1 // loop_footer
      %s20 = sadd.s32 1, %s16
    $region7: #{intersection_rnn_forward.1} parent=1 // loop_footer_branch
      %15 = sbr.rel target = $region3
    $region8: #{intersection_rnn_forward.1} parent=1 // loop_exit
      _
    %598 = vsyncpa [#allocation4], 1
    %s599 = scalar_lea.sflag [#allocation4], 1
    %600 = vsyncpa %s599, 1
    %601 = vsyncpa [#allocation6], 1
    %s602 = scalar_lea.sflag [#allocation6], 1
    %603 = vsyncpa %s602, 1
    %604 = vsyncpa [#allocation9], 1

</llo_original>
